<compile_context>
chip_gen: v5e
topology: v5e:2x2
jax: 0.10.0
libtpu: 0.0.40
codegen_flags: <defaults>
</compile_context>

<pallas_src>
import functools
import math

import jax
import jax.numpy as jnp
from jax.experimental import pallas as pl
from jax.experimental.pallas import tpu as pltpu


def _round_up(x, m):
    return ((x + m - 1) // m) * m


def _tile(dim, target):
    """Pick a tile size and padded extent. Full-dim block if dim fits in one tile."""
    if dim <= target:
        return dim, dim
    return target, _round_up(dim, target)


# --------------------------------------------------------------------------- #
# Linear:  y = x @ W^T   (W stored (out_features, in_features), never transposed)
# --------------------------------------------------------------------------- #
def _linear_kernel(x_ref, w_ref, o_ref, acc_ref):
    @pl.when(pl.program_id(2) == 0)
    def _():
        acc_ref[...] = jnp.zeros_like(acc_ref)

    acc_ref[...] += jax.lax.dot_general(
        x_ref[...], w_ref[...],
        dimension_numbers=(((1,), (1,)), ((), ())),   # contract last dims: x @ W^T
        preferred_element_type=jnp.float32)

    @pl.when(pl.program_id(2) == pl.num_programs(2) - 1)
    def _():
        o_ref[...] = acc_ref[...].astype(o_ref.dtype)


def linear_wt(x2d, w, *, tm=256, tn=256, tk=512):
    """x2d: (M, K), w: (N, K) -> (M, N) = x2d @ w^T."""
    M, K = x2d.shape
    N, Kw = w.shape
    assert K == Kw
    tm, Mp = _tile(M, tm)
    tn, Np = _tile(N, tn)
    tk, Kp = _tile(K, tk)
    if (Mp, Kp) != (M, K):
        x2d = jnp.pad(x2d, ((0, Mp - M), (0, Kp - K)))
    if (Np, Kp) != (N, K):
        w = jnp.pad(w, ((0, Np - N), (0, Kp - K)))

    itemsize = jnp.dtype(x2d.dtype).itemsize
    cost = pl.CostEstimate(
        flops=2 * Mp * Np * Kp,
        transcendentals=0,
        bytes_accessed=(Mp * Kp + Np * Kp + Mp * Np) * itemsize)

    out = pl.pallas_call(
        _linear_kernel,
        out_shape=jax.ShapeDtypeStruct((Mp, Np), x2d.dtype),
        grid_spec=pltpu.PrefetchScalarGridSpec(
            num_scalar_prefetch=0,
            grid=(Mp // tm, Np // tn, Kp // tk),
            in_specs=[
                pl.BlockSpec((tm, tk), lambda i, j, kk: (i, kk)),
                pl.BlockSpec((tn, tk), lambda i, j, kk: (j, kk)),
            ],
            out_specs=pl.BlockSpec((tm, tn), lambda i, j, kk: (i, j)),
            scratch_shapes=[pltpu.VMEM((tm, tn), jnp.float32)],
        ),
        compiler_params=pltpu.CompilerParams(
            dimension_semantics=("parallel", "parallel", "arbitrary")),
        cost_estimate=cost,
    )(x2d, w)
    return out[:M, :N]


# --------------------------------------------------------------------------- #
# Causal flash attention over (batch*heads, seq, d_head)
# --------------------------------------------------------------------------- #
def _flash_attn_kernel(q_ref, k_ref, v_ref, o_ref, m_sc, l_sc, acc_sc, *, scale):
    qi = pl.program_id(1)
    ki = pl.program_id(2)
    tq = q_ref.shape[1]
    tk = k_ref.shape[1]

    @pl.when(ki == 0)
    def _():
        m_sc[...] = jnp.full_like(m_sc, -jnp.inf)
        l_sc[...] = jnp.zeros_like(l_sc)
        acc_sc[...] = jnp.zeros_like(acc_sc)

    q = q_ref[0]                                   # (tq, dk)
    k = k_ref[0]                                   # (tk, dk)
    s = jax.lax.dot_general(
        q, k, dimension_numbers=(((1,), (1,)), ((), ())),
        preferred_element_type=jnp.float32) * scale          # (tq, tk)

    # Causal mask on absolute positions (also neutralizes right-padded KV rows).
    row = qi * tq + jax.lax.broadcasted_iota(jnp.int32, (tq, tk), 0)
    col = ki * tk + jax.lax.broadcasted_iota(jnp.int32, (tq, tk), 1)
    s = jnp.where(col <= row, s, jnp.float32(-1e30))

    m_prev = m_sc[...]                                        # (tq, 1)
    m_new = jnp.maximum(m_prev, s.max(axis=-1, keepdims=True))
    alpha = jnp.exp(m_prev - m_new)
    p = jnp.exp(s - m_new)
    l_sc[...] = alpha * l_sc[...] + p.sum(axis=-1, keepdims=True)
    acc_sc[...] = alpha * acc_sc[...] + jnp.dot(
        p.astype(v_ref.dtype), v_ref[0], preferred_element_type=jnp.float32)
    m_sc[...] = m_new

    @pl.when(ki == pl.num_programs(2) - 1)
    def _():
        o_ref[0] = (acc_sc[...] / l_sc[...]).astype(o_ref.dtype)


def causal_attention(q, k, v, *, tile=128):
    """q, k, v: (BH, S, Dk) -> (BH, S, Dk) causal attention per leading slice."""
    BH, S, Dk = q.shape
    scale = 1.0 / math.sqrt(Dk)
    t, Sp = _tile(S, tile)
    if Sp != S:
        pad = ((0, 0), (0, Sp - S), (0, 0))
        q = jnp.pad(q, pad)
        k = jnp.pad(k, pad)
        v = jnp.pad(v, pad)

    itemsize = jnp.dtype(q.dtype).itemsize
    cost = pl.CostEstimate(
        flops=4 * BH * Sp * Sp * Dk,
        transcendentals=BH * Sp * Sp,
        bytes_accessed=4 * BH * Sp * Dk * itemsize)

    out = pl.pallas_call(
        functools.partial(_flash_attn_kernel, scale=scale),
        out_shape=jax.ShapeDtypeStruct((BH, Sp, Dk), q.dtype),
        grid_spec=pltpu.PrefetchScalarGridSpec(
            num_scalar_prefetch=0,
            grid=(BH, Sp // t, Sp // t),
            in_specs=[
                pl.BlockSpec((1, t, Dk), lambda b, qi, ki: (b, qi, 0)),
                pl.BlockSpec((1, t, Dk), lambda b, qi, ki: (b, ki, 0)),
                pl.BlockSpec((1, t, Dk), lambda b, qi, ki: (b, ki, 0)),
            ],
            out_specs=pl.BlockSpec((1, t, Dk), lambda b, qi, ki: (b, qi, 0)),
            scratch_shapes=[
                pltpu.VMEM((t, 1), jnp.float32),    # running max
                pltpu.VMEM((t, 1), jnp.float32),    # running denom
                pltpu.VMEM((t, Dk), jnp.float32),   # output accumulator
            ],
        ),
        compiler_params=pltpu.CompilerParams(
            dimension_semantics=("parallel", "parallel", "arbitrary")),
        cost_estimate=cost,
    )(q, k, v)
    return out[:, :S, :]


# --------------------------------------------------------------------------- #
# Multi-head self-attention forward (matches the PyTorch module semantics)
# --------------------------------------------------------------------------- #
def multi_head_self_attention(x, wq, wk, wv, wo, num_heads):
    orig_shape = x.shape
    S, D = orig_shape[-2], orig_shape[-1]
    H = num_heads
    assert D % H == 0
    Dk = D // H
    B = 1
    for d in orig_shape[:-2]:
        B *= d

    x2d = x.reshape(B * S, D)
    q = linear_wt(x2d, wq)          # x @ WQ^T
    k = linear_wt(x2d, wk)
    v = linear_wt(x2d, wv)

    def split_heads(t):
        return (t.reshape(B, S, H, Dk)
                 .transpose(0, 2, 1, 3)
                 .reshape(B * H, S, Dk))

    attn = causal_attention(split_heads(q), split_heads(k), split_heads(v))
    attn = (attn.reshape(B, H, S, Dk)
                .transpose(0, 2, 1, 3)
                .reshape(B * S, D))
    out = linear_wt(attn, wo)       # attn @ WO^T
    return out.reshape(orig_shape)


# --------------------------------------------------------------------------- #
# Pure-JAX reference (same math as the PyTorch module)
# --------------------------------------------------------------------------- #
def mhsa_reference(x, wq, wk, wv, wo, num_heads):
    S, D = x.shape[-2], x.shape[-1]
    H = num_heads
    Dk = D // H

    def proj(w):
        y = jnp.einsum('...sd,ed->...se', x, w)               # x @ w^T
        y = y.reshape(*x.shape[:-1], H, Dk)
        return jnp.swapaxes(y, -3, -2)                         # (..., H, S, Dk)

    Q, K, V = proj(wq), proj(wk), proj(wv)
    scores = jnp.einsum('...qd,...kd->...qk', Q, K) / math.sqrt(Dk)
    mask = jnp.tril(jnp.ones((S, S), dtype=bool))
    scores = jnp.where(mask, scores, -jnp.inf)
    p = jax.nn.softmax(scores, axis=-1)
    attn = jnp.einsum('...qk,...kd->...qd', p, V)
    attn = jnp.swapaxes(attn, -3, -2).reshape(*x.shape[:-1], D)
    return jnp.einsum('...se,de->...sd', attn, wo)             # attn @ wo^T


if __name__ == "__main__":
    key = jax.random.PRNGKey(0)
    batch, seq, d_model, num_heads = 2, 8, 32, 4

    k_x, k_q, k_k, k_v, k_o = jax.random.split(key, 5)
    x = jax.random.normal(k_x, (batch, seq, d_model), jnp.float32)

    stdev = (2.0 / (d_model + d_model)) ** 0.5

    def init_w(k):
        w = jax.random.truncated_normal(k, -3.0, 3.0, (d_model, d_model), jnp.float32)
        return w * stdev

    wq, wk, wv, wo = init_w(k_q), init_w(k_k), init_w(k_v), init_w(k_o)

    out = multi_head_self_attention(x, wq, wk, wv, wo, num_heads)
    jax.block_until_ready(out)

    ref = mhsa_reference(x, wq, wk, wv, wo, num_heads)
    assert out.shape == x.shape
    assert jnp.allclose(out, ref, atol=1e-4, rtol=1e-4), float(jnp.max(jnp.abs(out - ref)))

    print("KERNEL_OK")
</pallas_src>

<mosaic_0001>
module attributes {stable_mosaic.version = 11 : i64} {
  func.func @_linear_kernel(%arg0: i32, %arg1: i32, %arg2: i32, %arg3: memref<16x32xf32, #tpu.memory_space<vmem>>, %arg4: memref<32x32xf32, #tpu.memory_space<vmem>>, %arg5: memref<16x32xf32, #tpu.memory_space<vmem>>, %arg6: memref<16x32xf32, #tpu.memory_space<vmem>>) attributes {dimension_semantics = [#tpu.dimension_semantics<parallel>, #tpu.dimension_semantics<parallel>, #tpu.dimension_semantics<arbitrary>], iteration_bounds = array<i64: 1, 1, 1>, scalar_prefetch = 0 : i64, scratch_operands = 1 : i64, tpu.core_type = #tpu.core_type<tc>, window_params = [{transform_indices = @transform_0, window_bounds = array<i64: 16, 32>}, {transform_indices = @transform_1, window_bounds = array<i64: 32, 32>}, {transform_indices = @transform_2, window_bounds = array<i64: 16, 32>}]} {
    %c0_i32 = arith.constant 0 : i32
    %0 = arith.cmpi eq, %arg2, %c0_i32 : i32
    %1 = arith.extui %0 : i1 to i32
    %c0_i32_0 = arith.constant 0 : i32
    %2 = arith.cmpi ne, %1, %c0_i32_0 : i32
    scf.if %2 {
      %cst_10 = arith.constant 0.000000e+00 : f32
      %12 = vector.broadcast %cst_10 : f32 to vector<16x32xf32>
      %c0_11 = arith.constant 0 : index
      %c0_12 = arith.constant 0 : index
      %13 = vector.load %arg6[%c0_11, %c0_12] : memref<16x32xf32, #tpu.memory_space<vmem>>, vector<16x32xf32>
      tpu.vector_store %arg6[%c0_11, %c0_12], %12 {strides = array<i32>} : memref<16x32xf32, #tpu.memory_space<vmem>>, vector<16x32xf32>,
    } else {
    }
    %c0 = arith.constant 0 : index
    %c0_1 = arith.constant 0 : index
    %3 = vector.load %arg6[%c0, %c0_1] : memref<16x32xf32, #tpu.memory_space<vmem>>, vector<16x32xf32>
    %c0_2 = arith.constant 0 : index
    %c0_3 = arith.constant 0 : index
    %4 = vector.load %arg3[%c0_2, %c0_3] : memref<16x32xf32, #tpu.memory_space<vmem>>, vector<16x32xf32>
    %c0_4 = arith.constant 0 : index
    %c0_5 = arith.constant 0 : index
    %5 = vector.load %arg4[%c0_4, %c0_5] : memref<32x32xf32, #tpu.memory_space<vmem>>, vector<32x32xf32>
    %cst = arith.constant dense<0.000000e+00> : vector<16x32xf32>
    %6 = tpu.matmul %4, %5, %cst {dimension_numbers = #tpu.dot_dimension_numbers<[1], [1], [0], [0], [0, 0, 1, 0], [], []>} : vector<16x32xf32>, vector<32x32xf32>, vector<16x32xf32> -> vector<16x32xf32>
    %7 = arith.addf %3, %6 : vector<16x32xf32>
    %c0_6 = arith.constant 0 : index
    %c0_7 = arith.constant 0 : index
    %8 = vector.load %arg6[%c0_6, %c0_7] : memref<16x32xf32, #tpu.memory_space<vmem>>, vector<16x32xf32>
    tpu.vector_store %arg6[%c0_6, %c0_7], %7 {strides = array<i32>} : memref<16x32xf32, #tpu.memory_space<vmem>>, vector<16x32xf32>,
    %c0_i32_8 = arith.constant 0 : i32
    %9 = arith.cmpi eq, %arg2, %c0_i32_8 : i32
    %10 = arith.extui %9 : i1 to i32
    %c0_i32_9 = arith.constant 0 : i32
    %11 = arith.cmpi ne, %10, %c0_i32_9 : i32
    scf.if %11 {
      %c0_10 = arith.constant 0 : index
      %c0_11 = arith.constant 0 : index
      %12 = vector.load %arg6[%c0_10, %c0_11] : memref<16x32xf32, #tpu.memory_space<vmem>>, vector<16x32xf32>
      %c0_12 = arith.constant 0 : index
      %c0_13 = arith.constant 0 : index
      %13 = vector.load %arg5[%c0_12, %c0_13] : memref<16x32xf32, #tpu.memory_space<vmem>>, vector<16x32xf32>
      tpu.vector_store %arg5[%c0_12, %c0_13], %12 {strides = array<i32>} : memref<16x32xf32, #tpu.memory_space<vmem>>, vector<16x32xf32>,
    } else {
    }
    return
  }
  func.func @transform_0(%arg0: i32, %arg1: i32, %arg2: i32) -> (i32, i32) {
    %c0_i32 = arith.constant 0 : i32
    return %arg0, %arg2 : i32, i32
  }
  func.func @transform_1(%arg0: i32, %arg1: i32, %arg2: i32) -> (i32, i32) {
    %c0_i32 = arith.constant 0 : i32
    return %arg1, %arg2 : i32, i32
  }
  func.func @transform_2(%arg0: i32, %arg1: i32, %arg2: i32) -> (i32, i32) {
    %c0_i32 = arith.constant 0 : i32
    return %arg0, %arg1 : i32, i32
  }
}

</mosaic_0001>

<llo_original>
// kernel: tpu_custom_call.1
$region0: #{tpu_custom_call.1}
  #allocation0 [shape = 'u32[]', space=smem, size = 0x4, offset = 0x4, fixed_abs, tag = 'smem constant byte address 0x4 - core index']
  #allocation1 [shape = 'u32[72,128]{1,0:T(1,128)}', space=vmem, size = 0x9000, scoped, tag = 'internal scratch']
  #allocation2 [shape = 'f32[16,32]{1,0:T(8,128)}', space=vmem, size = 0x2000, scoped, tag = 'scratch operand']
  %s0 = inlined_call_operand.hbm [shape: f32[16,32], index: 0, kind: input, shape index: {}]
  %s1 = inlined_call_operand.hbm [shape: f32[32,32], index: 1, kind: input, shape index: {}]
  %s2 = inlined_call_operand.hbm [shape: f32[16,32], index: 2, kind: output, shape index: {}]
  %s3 = sld [smem:[#allocation0]]
  $region34: #{tpu_custom_call.1} parent=0
    _
  %s5 = ssub.s32 1, %s3
  %s6 = scalar_select 0, %s5, %s3
  $region1: #{tpu_custom_call.1} parent=0
    #allocation3 [shape = 'u8[8192]{0}', space=vmem, size = 0x2000, scoped, tag = 'input window, operand 0, single buffered']
    #allocation4 [shape = 's32[1]{0}', space=sflag, size = 0x4, scoped, tag = 'scoped memory for tpu_custom_call.1']
    #allocation5 [shape = 's32[1]{0}', space=sflag, size = 0x4, scoped, tag = 'scoped memory for tpu_custom_call.1']
    #allocation6 [shape = 'u8[16384]{0}', space=vmem, size = 0x4000, scoped, tag = 'input window, operand 1, single buffered']
    #allocation7 [shape = 's32[1]{0}', space=sflag, size = 0x4, scoped, tag = 'scoped memory for tpu_custom_call.1']
    #allocation8 [shape = 'u8[8192]{0}', space=vmem, size = 0x2000, scoped, tag = 'output window, operand 0, single buffered']
    %7 = vsyncpa [#allocation4], 0
    %8 = vsyncpa [#allocation7], 0
    %9 = vsyncpa [#allocation5], 0
    // Predicated region
    $region2: #{tpu_custom_call.1} parent=1 // pred_check
      _
    $region3: #{tpu_custom_call.1} parent=1 // pred_check_branch
      %11 = sbr.rel (0) target = $region5
    $region4: #{tpu_custom_call.1} parent=1 // pred_region
      %13 = vsyncadd [#allocation4], 0
      %s14 = sshll.u32 %s0, 4
      %s15 = int_to_ptr.hbm [resolvable:$true] %s14
      %s16 = sshll.u32 [#allocation3], 4
      %s17 = int_to_ptr.vmem [resolvable:$true] %s16
      %22 = dma.hbm_to_vmem [thread:$0]  %s15, 256, %s17, [#allocation4], 128, 128, 8
    $region5: #{tpu_custom_call.1} parent=1 // pred_fallthru
      _
    // Predicated region
    $region6: #{tpu_custom_call.1} parent=1 // pred_check
      _
    $region7: #{tpu_custom_call.1} parent=1 // pred_check_branch
      %24 = sbr.rel (0) target = $region9
    $region8: #{tpu_custom_call.1} parent=1 // pred_region
      %26 = vsyncadd [#allocation7], 0
      %s27 = sshll.u32 %s1, 4
      %s28 = int_to_ptr.hbm [resolvable:$true] %s27
      %s29 = sshll.u32 [#allocation6], 4
      %s30 = int_to_ptr.vmem [resolvable:$true] %s29
      %35 = dma.hbm_to_vmem [thread:$0]  %s28, 512, %s30, [#allocation7], 128, 128, 8
    $region9: #{tpu_custom_call.1} parent=1 // pred_fallthru
      _
    // Predicated region
    $region10: #{tpu_custom_call.1} parent=1 // pred_check
      _
    $region11: #{tpu_custom_call.1} parent=1 // pred_check_branch
      %37 = sbr.rel (0) target = $region13
    $region12: #{tpu_custom_call.1} parent=1 // pred_region
      %39 = dma.done [#allocation4], 256
    $region13: #{tpu_custom_call.1} parent=1 // pred_fallthru
      _
    // Predicated region
    $region14: #{tpu_custom_call.1} parent=1 // pred_check
      _
    $region15: #{tpu_custom_call.1} parent=1 // pred_check_branch
      %41 = sbr.rel (0) target = $region17
    $region16: #{tpu_custom_call.1} parent=1 // pred_region
      %43 = dma.done [#allocation7], 512
    $region17: #{tpu_custom_call.1} parent=1 // pred_fallthru
      _
    %p44 = scmp.eq.s32.totalorder 0, 0
    // Predicated region
    $region18: #{tpu_custom_call.1} parent=1 // pred_check
      %p45 = pneg %p44
    $region19: #{tpu_custom_call.1} parent=1 // pred_check_branch
      %47 = sbr.rel (%p45) target = $region21
    $region20: #{tpu_custom_call.1} parent=1 // pred_region
      %vm48 = vcmask 261120
      %49 = vst.msk [vmem:[#allocation2] sm:$0xff] %vm48, 0.0
      %50 = vst.msk [vmem:[#allocation2 + $0x8] sm:$0xff] %vm48, 0.0
    $region21: #{tpu_custom_call.1} parent=1 // pred_fallthru
      _
    %v51 = vld [vmem:[#allocation2] sm:$0xff]
    %v52 = vld [vmem:[#allocation2 + $0x8] sm:$0xff]
    %v53 = vld [vmem:[#allocation3] sm:$0xff]
    %v54 = vld [vmem:[#allocation3 + $0x8] sm:$0xff]
    %v55 = vld [vmem:[#allocation6] sm:$0xff]
    %v56 = vld [vmem:[#allocation6 + $0x8] sm:$0xff]
    %v57 = vld [vmem:[#allocation6 + $0x10] sm:$0xff]
    %v58 = vld [vmem:[#allocation6 + $0x18] sm:$0xff]
    %vm59 = vcmask 261120
    %v61 = vsel %vm59, %v53, 0
    %v64 = vsel %vm59, %v54, 0
    %v67 = vsel %vm59, %v55, 0
    %v70 = vsel %vm59, %v56, 0
    %v73 = vsel %vm59, %v57, 0
    %v76 = vsel %vm59, %v58, 0
    %78 = vmatpush.xpose.msra.mxu0 0.0
    %79 = vmatpush.xpose.msra.mxu0 0.0
    %80 = vmatpush.xpose.msra.mxu0 0.0
    %81 = vmatpush.xpose.msra.mxu0 0.0
    %82 = vmatpush.xpose.msra.mxu0 0.0
    %83 = vmatpush.xpose.msra.mxu0 0.0
    %84 = vmatpush.xpose.msra.mxu0 0.0
    %85 = vmatpush.xpose.msra.mxu0 0.0
    %86 = vmatpush.xpose.msra.mxu0 0.0
    %87 = vmatpush.xpose.msra.mxu0 0.0
    %88 = vmatpush.xpose.msra.mxu0 0.0
    %89 = vmatpush.xpose.msra.mxu0 0.0
    %90 = vmatpush.xpose.msra.mxu0 %v76
    %91 = vmatpush.xpose.msra.mxu0 %v73
    %92 = vmatpush.xpose.msra.mxu0 %v70
    %93 = vmatpush.xpose.msra.mxu0 %v67
    %94 = vmatmul.f32.gmra.mxu0 %v61
    %v95 = vpop.f32.mrf.mxu0
    %v96 = vadd.f32 0.0, %v95
    %97 = vmatmul.f32.gmra.mxu0 %v64
    %v98 = vpop.f32.mrf.mxu0
    %v99 = vadd.f32 0.0, %v98
    %100 = vdwg.mxu0
    %v101 = vadd.f32 %v51, %v96
    %v102 = vadd.f32 %v52, %v99
    %103 = vst.msk [vmem:[#allocation2] sm:$0xff] %vm59, %v101
    %104 = vst.msk [vmem:[#allocation2 + $0x8] sm:$0xff] %vm59, %v102
    // Predicated region
    $region22: #{tpu_custom_call.1} parent=1 // pred_check
      %p105 = pneg %p44
    $region23: #{tpu_custom_call.1} parent=1 // pred_check_branch
      %107 = sbr.rel (%p105) target = $region25
    $region24: #{tpu_custom_call.1} parent=1 // pred_region
      %v108 = vld [vmem:[#allocation2] sm:$0xff]
      %v109 = vld [vmem:[#allocation2 + $0x8] sm:$0xff]
      %110 = vst.msk [vmem:[#allocation8] sm:$0xff] %vm59, %v108
      %111 = vst.msk [vmem:[#allocation8 + $0x8] sm:$0xff] %vm59, %v109
    $region25: #{tpu_custom_call.1} parent=1 // pred_fallthru
      _
    // Predicated region
    $region26: #{tpu_custom_call.1} parent=1 // pred_check
      _
    $region27: #{tpu_custom_call.1} parent=1 // pred_check_branch
      %113 = sbr.rel (0) target = $region29
    $region28: #{tpu_custom_call.1} parent=1 // pred_region
      %115 = vsyncadd [#allocation5], 0
      %s116 = sshll.u32 [#allocation8], 4
      %s117 = int_to_ptr.vmem [resolvable:$true] %s116
      %s118 = sshll.u32 %s2, 4
      %s119 = int_to_ptr.hbm [resolvable:$true] %s118
      %124 = dma.vmem_to_hbm [thread:$0]  %s117, 256, %s119, [#allocation5], 128, 128, 8
    $region29: #{tpu_custom_call.1} parent=1 // pred_fallthru
      _
    // Predicated region
    $region30: #{tpu_custom_call.1} parent=1 // pred_check
      _
    $region31: #{tpu_custom_call.1} parent=1 // pred_check_branch
      %126 = sbr.rel (0) target = $region33
    $region32: #{tpu_custom_call.1} parent=1 // pred_region
      %128 = dma.done [#allocation5], 256
    $region33: #{tpu_custom_call.1} parent=1 // pred_fallthru
      _
    %129 = vsyncpa [#allocation4], 1
    %130 = vsyncpa [#allocation7], 1
    %131 = vsyncpa [#allocation5], 1

</llo_original>
